<compile_context>
chip_gen: v7x
topology: tpu7x:2x2x1
jax: 0.10.0
libtpu: 0.0.40
codegen_flags: <defaults>
</compile_context>

<pallas_src>
import functools

import jax
import jax.numpy as jnp
from jax.experimental import pallas as pl
from jax.experimental.pallas import tpu as pltpu

OUT_PAD = 128  # lane-dense padded width for the 3-wide output layer


def arena_kernel(x_ref, w1_ref, b1_ref, w2_ref, b2_ref, w3_ref, b3_ref, o_ref):
    x = x_ref[...]                                                     # (TB, D) bf16
    # layer 1: Linear(D, 128) + ReLU  (bf16 MXU, f32 accumulate)
    h1 = jnp.dot(x, w1_ref[...], preferred_element_type=jnp.float32) + b1_ref[...]
    h1 = jnp.maximum(h1, 0.0).astype(jnp.bfloat16)
    # layer 2: Linear(128, 64) + ReLU
    h2 = jnp.dot(h1, w2_ref[...], preferred_element_type=jnp.float32) + b2_ref[...]
    h2 = jnp.maximum(h2, 0.0).astype(jnp.bfloat16)
    # layer 3: Linear(64, OUT_PAD); padded lanes carry bias -1e30 so they vanish in the lse
    logits = jnp.dot(h2, w3_ref[...], preferred_element_type=jnp.float32) + b3_ref[...]
    # log_softmax over the lane-dense 128-wide logits (padded lanes: exp(-huge) == 0)
    m = jnp.max(logits, axis=-1, keepdims=True)
    shifted = logits - m
    lse = jnp.log(jnp.sum(jnp.exp(shifted), axis=-1, keepdims=True))
    o_ref[...] = shifted - lse


@functools.partial(jax.jit, static_argnames=("tb",))
def arena_network_forward(x, params, *, tb=1024):
    """x: any shape whose trailing dims flatten to input_size; params: dict of f32 weights."""
    input_size = params["w1"].shape[0]
    x2d = x.reshape(-1, input_size).astype(jnp.bfloat16)               # x.view(-1, input_size)
    B, D = x2d.shape

    # batch tile: multiple of 8 (sublane constraint), capped at `tb`
    b_pad8 = ((B + 7) // 8) * 8
    TB = min(tb, b_pad8)
    num_tiles = pl.cdiv(B, TB)
    B_pad = num_tiles * TB
    if B_pad != B:
        x2d = jnp.pad(x2d, ((0, B_pad - B), (0, 0)))

    # params: bf16 weights, f32 biases; layer 3 padded to a lane-dense 128-wide output
    w1 = params["w1"].astype(jnp.bfloat16)
    b1 = params["b1"].astype(jnp.float32)
    w2 = params["w2"].astype(jnp.bfloat16)
    b2 = params["b2"].astype(jnp.float32)
    w3p = jnp.zeros((64, OUT_PAD), jnp.bfloat16).at[:, :3].set(params["w3"].astype(jnp.bfloat16))
    b3p = jnp.full((1, OUT_PAD), -1e30, jnp.float32).at[:, :3].set(params["b3"].astype(jnp.float32))

    flops = 2 * B_pad * (D * 128 + 128 * 64 + 64 * OUT_PAD)
    bytes_accessed = (B_pad * D * 2                                    # bf16 x
                      + (D * 128 + 128 * 64 + 64 * OUT_PAD) * 2        # bf16 weights
                      + (128 + 64 + OUT_PAD) * 4                       # f32 biases
                      + B_pad * OUT_PAD * 4)                           # f32 out
    cost = pl.CostEstimate(flops=flops,
                           transcendentals=B_pad * (OUT_PAD + 1),
                           bytes_accessed=bytes_accessed)

    out = pl.pallas_call(
        arena_kernel,
        out_shape=jax.ShapeDtypeStruct((B_pad, OUT_PAD), jnp.float32),
        grid=(num_tiles,),
        in_specs=[
            pl.BlockSpec((TB, D), lambda i: (i, 0)),        # x tile, double-buffered
            pl.BlockSpec((D, 128), lambda i: (0, 0)),       # w1 resident
            pl.BlockSpec((1, 128), lambda i: (0, 0)),       # b1
            pl.BlockSpec((128, 64), lambda i: (0, 0)),      # w2
            pl.BlockSpec((1, 64), lambda i: (0, 0)),        # b2
            pl.BlockSpec((64, OUT_PAD), lambda i: (0, 0)),  # w3 (padded)
            pl.BlockSpec((1, OUT_PAD), lambda i: (0, 0)),   # b3 (padded, -1e30 lanes)
        ],
        out_specs=pl.BlockSpec((TB, OUT_PAD), lambda i: (i, 0)),
        compiler_params=pltpu.CompilerParams(dimension_semantics=("parallel",)),
        cost_estimate=cost,
    )(x2d, w1, b1, w2, b2, w3p, b3p)

    return out[:B, :3]                                                 # drop pad rows / lanes


def init_params(input_size, key):
    """Deterministic synthetic init matching ArenaNetwork's shapes (weights stored (in, out))."""
    k1, k2, k3 = jax.random.split(key, 3)

    def linear(k, fan_in, fan_out):
        bound = 1.0 / jnp.sqrt(fan_in)
        kw, kb = jax.random.split(k)
        w = jax.random.uniform(kw, (fan_in, fan_out), jnp.float32, -bound, bound)
        b = jax.random.uniform(kb, (1, fan_out), jnp.float32, -bound, bound)
        return w, b

    w1, b1 = linear(k1, input_size, 128)
    w2, b2 = linear(k2, 128, 64)
    w3, b3 = linear(k3, 64, 3)
    return {"w1": w1, "b1": b1, "w2": w2, "b2": b2, "w3": w3, "b3": b3}


if __name__ == "__main__":
    key = jax.random.PRNGKey(0)
    kx, kp = jax.random.split(key)

    # Small example input: batch=2, channels=4, spatial=16x16 -> input_size = 4*16*16 = 1024
    x = jax.random.normal(kx, (2, 4, 16, 16), jnp.float32)
    input_size = 4 * 16 * 16

    params = init_params(input_size, kp)

    out = arena_network_forward(x, params)
    out = jax.block_until_ready(out)

    # sanity check against a pure-JAX f32 reference (tolerance loosened for bf16 inputs/weights)
    x2d = x.reshape(-1, input_size)
    h1 = jnp.maximum(x2d @ params["w1"] + params["b1"], 0.0)
    h2 = jnp.maximum(h1 @ params["w2"] + params["b2"], 0.0)
    logits = h2 @ params["w3"] + params["b3"]
    ref = jax.nn.log_softmax(logits, axis=1)
    assert out.shape == (2, 3)
    assert jnp.allclose(out, ref, atol=3e-2, rtol=3e-2)

    print("KERNEL_OK")
</pallas_src>

<mosaic_0001>
module attributes {stable_mosaic.version = 11 : i64} {
  func.func @arena_kernel(%arg0: i32, %arg1: memref<8x1024xbf16, #tpu.memory_space<vmem>>, %arg2: memref<1024x128xbf16, #tpu.memory_space<vmem>>, %arg3: memref<1x128xf32, #tpu.memory_space<vmem>>, %arg4: memref<128x64xbf16, #tpu.memory_space<vmem>>, %arg5: memref<1x64xf32, #tpu.memory_space<vmem>>, %arg6: memref<64x128xbf16, #tpu.memory_space<vmem>>, %arg7: memref<1x128xf32, #tpu.memory_space<vmem>>, %arg8: memref<8x128xf32, #tpu.memory_space<vmem>>) attributes {dimension_semantics = [#tpu.dimension_semantics<parallel>], iteration_bounds = array<i64: 1>, scalar_prefetch = 0 : i64, scratch_operands = 0 : i64, tpu.core_type = #tpu.core_type<tc>, window_params = [{transform_indices = @transform_0, window_bounds = array<i64: 8, 1024>}, {pipeline_mode = #tpu.pipeline_mode<synchronous>, transform_indices = @transform_1, window_bounds = array<i64: 1024, 128>}, {pipeline_mode = #tpu.pipeline_mode<synchronous>, transform_indices = @transform_2, window_bounds = array<i64: 1, 128>}, {pipeline_mode = #tpu.pipeline_mode<synchronous>, transform_indices = @transform_3, window_bounds = array<i64: 128, 64>}, {pipeline_mode = #tpu.pipeline_mode<synchronous>, transform_indices = @transform_4, window_bounds = array<i64: 1, 64>}, {pipeline_mode = #tpu.pipeline_mode<synchronous>, transform_indices = @transform_5, window_bounds = array<i64: 64, 128>}, {pipeline_mode = #tpu.pipeline_mode<synchronous>, transform_indices = @transform_6, window_bounds = array<i64: 1, 128>}, {transform_indices = @transform_7, window_bounds = array<i64: 8, 128>}]} {
    %c0 = arith.constant 0 : index
    %c0_0 = arith.constant 0 : index
    %0 = vector.load %arg1[%c0, %c0_0] : memref<8x1024xbf16, #tpu.memory_space<vmem>>, vector<8x1024xbf16>
    %c0_1 = arith.constant 0 : index
    %c0_2 = arith.constant 0 : index
    %1 = vector.load %arg2[%c0_1, %c0_2] : memref<1024x128xbf16, #tpu.memory_space<vmem>>, vector<1024x128xbf16>
    %cst = arith.constant dense<0.000000e+00> : vector<8x128xf32>
    %2 = tpu.matmul %0, %1, %cst {dimension_numbers = #tpu.dot_dimension_numbers<[1], [0], [0], [1], [0, 0, 1, 1], [], []>} : vector<8x1024xbf16>, vector<1024x128xbf16>, vector<8x128xf32> -> vector<8x128xf32>
    %c0_3 = arith.constant 0 : index
    %c0_4 = arith.constant 0 : index
    %3 = vector.load %arg3[%c0_3, %c0_4] : memref<1x128xf32, #tpu.memory_space<vmem>>, vector<1x128xf32>
    %4 = vector.broadcast %3 : vector<1x128xf32> to vector<8x128xf32>
    %5 = arith.addf %2, %4 : vector<8x128xf32>
    %cst_5 = arith.constant 0.000000e+00 : f32
    %6 = vector.broadcast %cst_5 : f32 to vector<8x128xf32>
    %7 = arith.maximumf %5, %6 : vector<8x128xf32>
    %8 = arith.truncf %7 : vector<8x128xf32> to vector<8x128xbf16>
    %c0_6 = arith.constant 0 : index
    %c0_7 = arith.constant 0 : index
    %9 = vector.load %arg4[%c0_6, %c0_7] : memref<128x64xbf16, #tpu.memory_space<vmem>>, vector<128x64xbf16>
    %cst_8 = arith.constant dense<0.000000e+00> : vector<8x64xf32>
    %10 = tpu.matmul %8, %9, %cst_8 {dimension_numbers = #tpu.dot_dimension_numbers<[1], [0], [0], [1], [0, 0, 1, 1], [], []>} : vector<8x128xbf16>, vector<128x64xbf16>, vector<8x64xf32> -> vector<8x64xf32>
    %c0_9 = arith.constant 0 : index
    %c0_10 = arith.constant 0 : index
    %11 = vector.load %arg5[%c0_9, %c0_10] : memref<1x64xf32, #tpu.memory_space<vmem>>, vector<1x64xf32>
    %12 = vector.broadcast %11 : vector<1x64xf32> to vector<8x64xf32>
    %13 = arith.addf %10, %12 : vector<8x64xf32>
    %cst_11 = arith.constant 0.000000e+00 : f32
    %14 = vector.broadcast %cst_11 : f32 to vector<8x64xf32>
    %15 = arith.maximumf %13, %14 : vector<8x64xf32>
    %16 = arith.truncf %15 : vector<8x64xf32> to vector<8x64xbf16>
    %c0_12 = arith.constant 0 : index
    %c0_13 = arith.constant 0 : index
    %17 = vector.load %arg6[%c0_12, %c0_13] : memref<64x128xbf16, #tpu.memory_space<vmem>>, vector<64x128xbf16>
    %cst_14 = arith.constant dense<0.000000e+00> : vector<8x128xf32>
    %18 = tpu.matmul %16, %17, %cst_14 {dimension_numbers = #tpu.dot_dimension_numbers<[1], [0], [0], [1], [0, 0, 1, 1], [], []>} : vector<8x64xbf16>, vector<64x128xbf16>, vector<8x128xf32> -> vector<8x128xf32>
    %c0_15 = arith.constant 0 : index
    %c0_16 = arith.constant 0 : index
    %19 = vector.load %arg7[%c0_15, %c0_16] : memref<1x128xf32, #tpu.memory_space<vmem>>, vector<1x128xf32>
    %20 = vector.broadcast %19 : vector<1x128xf32> to vector<8x128xf32>
    %21 = arith.addf %18, %20 : vector<8x128xf32>
    %cst_17 = arith.constant dense<0xFF800000> : vector<8xf32>
    %22 = vector.multi_reduction <maximumf>, %21, %cst_17 [1] : vector<8x128xf32> to vector<8xf32>
    %23 = vector.shape_cast %22 : vector<8xf32> to vector<8x1xf32>
    %24 = vector.broadcast %23 : vector<8x1xf32> to vector<8x128xf32>
    %25 = arith.subf %21, %24 : vector<8x128xf32>
    %26 = math.exp %25 : vector<8x128xf32>
    %cst_18 = arith.constant dense<0.000000e+00> : vector<8xf32>
    %27 = vector.multi_reduction <add>, %26, %cst_18 [1] : vector<8x128xf32> to vector<8xf32>
    %28 = vector.shape_cast %27 : vector<8xf32> to vector<8x1xf32>
    %29 = math.log %28 : vector<8x1xf32>
    %30 = vector.broadcast %29 : vector<8x1xf32> to vector<8x128xf32>
    %31 = arith.subf %25, %30 : vector<8x128xf32>
    %c0_19 = arith.constant 0 : index
    %c0_20 = arith.constant 0 : index
    %32 = vector.load %arg8[%c0_19, %c0_20] : memref<8x128xf32, #tpu.memory_space<vmem>>, vector<8x128xf32>
    tpu.vector_store %arg8[%c0_19, %c0_20], %31 {strides = array<i32>} : memref<8x128xf32, #tpu.memory_space<vmem>>, vector<8x128xf32>,
    return
  }
  func.func @transform_0(%arg0: i32) -> (i32, i32) {
    %c0_i32 = arith.constant 0 : i32
    %c0_i32_0 = arith.constant 0 : i32
    return %arg0, %c0_i32 : i32, i32
  }
  func.func @transform_1(%arg0: i32) -> (i32, i32) {
    %c0_i32 = arith.constant 0 : i32
    %c0_i32_0 = arith.constant 0 : i32
    %c0_i32_1 = arith.constant 0 : i32
    return %c0_i32, %c0_i32_0 : i32, i32
  }
  func.func @transform_2(%arg0: i32) -> (i32, i32) {
    %c0_i32 = arith.constant 0 : i32
    %c0_i32_0 = arith.constant 0 : i32
    %c0_i32_1 = arith.constant 0 : i32
    return %c0_i32, %c0_i32_0 : i32, i32
  }
  func.func @transform_3(%arg0: i32) -> (i32, i32) {
    %c0_i32 = arith.constant 0 : i32
    %c0_i32_0 = arith.constant 0 : i32
    %c0_i32_1 = arith.constant 0 : i32
    return %c0_i32, %c0_i32_0 : i32, i32
  }
  func.func @transform_4(%arg0: i32) -> (i32, i32) {
    %c0_i32 = arith.constant 0 : i32
    %c0_i32_0 = arith.constant 0 : i32
    %c0_i32_1 = arith.constant 0 : i32
    return %c0_i32, %c0_i32_0 : i32, i32
  }
  func.func @transform_5(%arg0: i32) -> (i32, i32) {
    %c0_i32 = arith.constant 0 : i32
    %c0_i32_0 = arith.constant 0 : i32
    %c0_i32_1 = arith.constant 0 : i32
    return %c0_i32, %c0_i32_0 : i32, i32
  }
  func.func @transform_6(%arg0: i32) -> (i32, i32) {
    %c0_i32 = arith.constant 0 : i32
    %c0_i32_0 = arith.constant 0 : i32
    %c0_i32_1 = arith.constant 0 : i32
    return %c0_i32, %c0_i32_0 : i32, i32
  }
  func.func @transform_7(%arg0: i32) -> (i32, i32) {
    %c0_i32 = arith.constant 0 : i32
    %c0_i32_0 = arith.constant 0 : i32
    return %arg0, %c0_i32 : i32, i32
  }
}

</mosaic_0001>

<llo_original>
// kernel: arena_network_forward.1
$region0: #{arena_network_forward.1}
  #allocation0 [shape = 'u32[]', space=smem, size = 0x4, offset = 0x4, fixed_abs, tag = 'smem constant byte address 0x4 - core index']
  #allocation1 [shape = 'u32[144,128]{1,0:T(1,128)}', space=vmem, size = 0x12000, scoped, tag = 'internal scratch']
  %s0 = inlined_call_operand.vmem [shape: bf16[8,1024], index: 0, kind: input, shape index: {}]
  %s1 = inlined_call_operand.vmem [shape: bf16[1024,128], index: 1, kind: input, shape index: {}]
  %s2 = inlined_call_operand.vmem [shape: f32[1,128], index: 2, kind: input, shape index: {}]
  %s3 = inlined_call_operand.vmem [shape: bf16[128,64], index: 3, kind: input, shape index: {}]
  %s4 = inlined_call_operand.vmem [shape: f32[1,64], index: 4, kind: input, shape index: {}]
  %s5 = inlined_call_operand.vmem [shape: bf16[64,128], index: 5, kind: input, shape index: {}]
  %s6 = inlined_call_operand.vmem [shape: f32[1,128], index: 6, kind: input, shape index: {}]
  %s7 = inlined_call_operand.vmem [shape: f32[8,128], index: 7, kind: output, shape index: {}]
  %s8 = sld [smem:[#allocation0]]
  $region38: #{arena_network_forward.1} parent=0
    _
  %s10 = ssub.s32 1, %s8
  %s11 = scalar_select 0, %s10, %s8
  // Predicated region
  $region2: #{arena_network_forward.1} parent=0 // pred_check
    _
  $region3: #{arena_network_forward.1} parent=0 // pred_check_branch
    %13 = sbr.rel (0) target = $region5
  $region4: #{arena_network_forward.1} parent=0 // pred_region
    _
  $region5: #{arena_network_forward.1} parent=0 // pred_fallthru
    _
  // Predicated region
  $region6: #{arena_network_forward.1} parent=0 // pred_check
    _
  $region7: #{arena_network_forward.1} parent=0 // pred_check_branch
    %15 = sbr.rel (0) target = $region9
  $region8: #{arena_network_forward.1} parent=0 // pred_region
    _
  $region9: #{arena_network_forward.1} parent=0 // pred_fallthru
    _
  // Predicated region
  $region10: #{arena_network_forward.1} parent=0 // pred_check
    _
  $region11: #{arena_network_forward.1} parent=0 // pred_check_branch
    %17 = sbr.rel (0) target = $region13
  $region12: #{arena_network_forward.1} parent=0 // pred_region
    _
  $region13: #{arena_network_forward.1} parent=0 // pred_fallthru
    _
  // Predicated region
  $region14: #{arena_network_forward.1} parent=0 // pred_check
    _
  $region15: #{arena_network_forward.1} parent=0 // pred_check_branch
    %19 = sbr.rel (0) target = $region17
  $region16: #{arena_network_forward.1} parent=0 // pred_region
    _
  $region17: #{arena_network_forward.1} parent=0 // pred_fallthru
    _
  // Predicated region
  $region18: #{arena_network_forward.1} parent=0 // pred_check
    _
  $region19: #{arena_network_forward.1} parent=0 // pred_check_branch
    %21 = sbr.rel (0) target = $region21
  $region20: #{arena_network_forward.1} parent=0 // pred_region
    _
  $region21: #{arena_network_forward.1} parent=0 // pred_fallthru
    _
  // Predicated region
  $region22: #{arena_network_forward.1} parent=0 // pred_check
    _
  $region23: #{arena_network_forward.1} parent=0 // pred_check_branch
    %23 = sbr.rel (0) target = $region25
  $region24: #{arena_network_forward.1} parent=0 // pred_region
    _
  $region25: #{arena_network_forward.1} parent=0 // pred_fallthru
    _
  // Predicated region
  $region26: #{arena_network_forward.1} parent=0 // pred_check
    _
  $region27: #{arena_network_forward.1} parent=0 // pred_check_branch
    %25 = sbr.rel (0) target = $region29
  $region28: #{arena_network_forward.1} parent=0 // pred_region
    _
  $region29: #{arena_network_forward.1} parent=0 // pred_fallthru
    _
  %v27 = vld [vmem:[%s0] sm:$0xff]
  %v28 = vld [vmem:[%s0 + $0x8] sm:$0xff]
  %v29 = vld [vmem:[%s0 + $0x10] sm:$0xff]
  %v30 = vld [vmem:[%s0 + $0x18] sm:$0xff]
  %v31 = vld [vmem:[%s1] sm:$0xf]
  %v32 = vld [vmem:[%s1 + $0x4] sm:$0xf]
  %v33 = vld [vmem:[%s1 + $0x8] sm:$0xf]
  %v34 = vld [vmem:[%s1 + $0xc] sm:$0xf]
  %v35 = vld [vmem:[%s1 + $0x10] sm:$0xf]
  %v36 = vld [vmem:[%s1 + $0x14] sm:$0xf]
  %v37 = vld [vmem:[%s1 + $0x18] sm:$0xf]
  %v38 = vld [vmem:[%s1 + $0x1c] sm:$0xf]
  %v39 = vld [vmem:[%s1 + $0x20] sm:$0xf]
  %v40 = vld [vmem:[%s1 + $0x24] sm:$0xf]
  %v41 = vld [vmem:[%s1 + $0x28] sm:$0xf]
  %v42 = vld [vmem:[%s1 + $0x2c] sm:$0xf]
  %v43 = vld [vmem:[%s1 + $0x30] sm:$0xf]
  %v44 = vld [vmem:[%s1 + $0x34] sm:$0xf]
  %v45 = vld [vmem:[%s1 + $0x38] sm:$0xf]
  %v46 = vld [vmem:[%s1 + $0x3c] sm:$0xf]
  %v47 = vld [vmem:[%s1 + $0x40] sm:$0xf]
  %v48 = vld [vmem:[%s1 + $0x44] sm:$0xf]
  %v49 = vld [vmem:[%s1 + $0x48] sm:$0xf]
  %v50 = vld [vmem:[%s1 + $0x4c] sm:$0xf]
  %v51 = vld [vmem:[%s1 + $0x50] sm:$0xf]
  %v52 = vld [vmem:[%s1 + $0x54] sm:$0xf]
  %v53 = vld [vmem:[%s1 + $0x58] sm:$0xf]
  %v54 = vld [vmem:[%s1 + $0x5c] sm:$0xf]
  %v55 = vld [vmem:[%s1 + $0x60] sm:$0xf]
  %v56 = vld [vmem:[%s1 + $0x64] sm:$0xf]
  %v57 = vld [vmem:[%s1 + $0x68] sm:$0xf]
  %v58 = vld [vmem:[%s1 + $0x6c] sm:$0xf]
  %v59 = vld [vmem:[%s1 + $0x70] sm:$0xf]
  %v60 = vld [vmem:[%s1 + $0x74] sm:$0xf]
  %v61 = vld [vmem:[%s1 + $0x78] sm:$0xf]
  %v62 = vld [vmem:[%s1 + $0x7c] sm:$0xf]
  %v63 = vld [vmem:[%s1 + $0x80] sm:$0xf]
  %v64 = vld [vmem:[%s1 + $0x84] sm:$0xf]
  %v65 = vld [vmem:[%s1 + $0x88] sm:$0xf]
  %v66 = vld [vmem:[%s1 + $0x8c] sm:$0xf]
  %v67 = vld [vmem:[%s1 + $0x90] sm:$0xf]
  %v68 = vld [vmem:[%s1 + $0x94] sm:$0xf]
  %v69 = vld [vmem:[%s1 + $0x98] sm:$0xf]
  %v70 = vld [vmem:[%s1 + $0x9c] sm:$0xf]
  %v71 = vld [vmem:[%s1 + $0xa0] sm:$0xf]
  %v72 = vld [vmem:[%s1 + $0xa4] sm:$0xf]
  %v73 = vld [vmem:[%s1 + $0xa8] sm:$0xf]
  %v74 = vld [vmem:[%s1 + $0xac] sm:$0xf]
  %v75 = vld [vmem:[%s1 + $0xb0] sm:$0xf]
  %v76 = vld [vmem:[%s1 + $0xb4] sm:$0xf]
  %v77 = vld [vmem:[%s1 + $0xb8] sm:$0xf]
  %v78 = vld [vmem:[%s1 + $0xbc] sm:$0xf]
  %v79 = vld [vmem:[%s1 + $0xc0] sm:$0xf]
  %v80 = vld [vmem:[%s1 + $0xc4] sm:$0xf]
  %v81 = vld [vmem:[%s1 + $0xc8] sm:$0xf]
  %v82 = vld [vmem:[%s1 + $0xcc] sm:$0xf]
  %v83 = vld [vmem:[%s1 + $0xd0] sm:$0xf]
  %v84 = vld [vmem:[%s1 + $0xd4] sm:$0xf]
  %v85 = vld [vmem:[%s1 + $0xd8] sm:$0xf]
  %v86 = vld [vmem:[%s1 + $0xdc] sm:$0xf]
  %v87 = vld [vmem:[%s1 + $0xe0] sm:$0xf]
  %v88 = vld [vmem:[%s1 + $0xe4] sm:$0xf]
  %v89 = vld [vmem:[%s1 + $0xe8] sm:$0xf]
  %v90 = vld [vmem:[%s1 + $0xec] sm:$0xf]
  %v91 = vld [vmem:[%s1 + $0xf0] sm:$0xf]
  %v92 = vld [vmem:[%s1 + $0xf4] sm:$0xf]
  %v93 = vld [vmem:[%s1 + $0xf8] sm:$0xf]
  %v94 = vld [vmem:[%s1 + $0xfc] sm:$0xf]
  %v95 = vld [vmem:[%s1 + $0x100] sm:$0xf]
  %v96 = vld [vmem:[%s1 + $0x104] sm:$0xf]
  %v97 = vld [vmem:[%s1 + $0x108] sm:$0xf]
  %v98 = vld [vmem:[%s1 + $0x10c] sm:$0xf]
  %v99 = vld [vmem:[%s1 + $0x110] sm:$0xf]
  %v100 = vld [vmem:[%s1 + $0x114] sm:$0xf]
  %v101 = vld [vmem:[%s1 + $0x118] sm:$0xf]
  %v102 = vld [vmem:[%s1 + $0x11c] sm:$0xf]
  %v103 = vld [vmem:[%s1 + $0x120] sm:$0xf]
  %v104 = vld [vmem:[%s1 + $0x124] sm:$0xf]
  %v105 = vld [vmem:[%s1 + $0x128] sm:$0xf]
  %v106 = vld [vmem:[%s1 + $0x12c] sm:$0xf]
  %v107 = vld [vmem:[%s1 + $0x130] sm:$0xf]
  %v108 = vld [vmem:[%s1 + $0x134] sm:$0xf]
  %v109 = vld [vmem:[%s1 + $0x138] sm:$0xf]
  %v110 = vld [vmem:[%s1 + $0x13c] sm:$0xf]
  %v111 = vld [vmem:[%s1 + $0x140] sm:$0xf]
  %v112 = vld [vmem:[%s1 + $0x144] sm:$0xf]
  %v113 = vld [vmem:[%s1 + $0x148] sm:$0xf]
  %v114 = vld [vmem:[%s1 + $0x14c] sm:$0xf]
  %v115 = vld [vmem:[%s1 + $0x150] sm:$0xf]
  %v116 = vld [vmem:[%s1 + $0x154] sm:$0xf]
  %v117 = vld [vmem:[%s1 + $0x158] sm:$0xf]
  %v118 = vld [vmem:[%s1 + $0x15c] sm:$0xf]
  %v119 = vld [vmem:[%s1 + $0x160] sm:$0xf]
  %v120 = vld [vmem:[%s1 + $0x164] sm:$0xf]
  %v121 = vld [vmem:[%s1 + $0x168] sm:$0xf]
  %v122 = vld [vmem:[%s1 + $0x16c] sm:$0xf]
  %v123 = vld [vmem:[%s1 + $0x170] sm:$0xf]
  %v124 = vld [vmem:[%s1 + $0x174] sm:$0xf]
  %v125 = vld [vmem:[%s1 + $0x178] sm:$0xf]
  %v126 = vld [vmem:[%s1 + $0x17c] sm:$0xf]
  %v127 = vld [vmem:[%s1 + $0x180] sm:$0xf]
  %v128 = vld [vmem:[%s1 + $0x184] sm:$0xf]
  %v129 = vld [vmem:[%s1 + $0x188] sm:$0xf]
  %v130 = vld [vmem:[%s1 + $0x18c] sm:$0xf]
  %v131 = vld [vmem:[%s1 + $0x190] sm:$0xf]
  %v132 = vld [vmem:[%s1 + $0x194] sm:$0xf]
  %v133 = vld [vmem:[%s1 + $0x198] sm:$0xf]
  %v134 = vld [vmem:[%s1 + $0x19c] sm:$0xf]
  %v135 = vld [vmem:[%s1 + $0x1a0] sm:$0xf]
  %v136 = vld [vmem:[%s1 + $0x1a4] sm:$0xf]
  %v137 = vld [vmem:[%s1 + $0x1a8] sm:$0xf]
  %v138 = vld [vmem:[%s1 + $0x1ac] sm:$0xf]
  %v139 = vld [vmem:[%s1 + $0x1b0] sm:$0xf]
  %v140 = vld [vmem:[%s1 + $0x1b4] sm:$0xf]
  %v141 = vld [vmem:[%s1 + $0x1b8] sm:$0xf]
  %v142 = vld [vmem:[%s1 + $0x1bc] sm:$0xf]
  %v143 = vld [vmem:[%s1 + $0x1c0] sm:$0xf]
  %v144 = vld [vmem:[%s1 + $0x1c4] sm:$0xf]
  %v145 = vld [vmem:[%s1 + $0x1c8] sm:$0xf]
  %v146 = vld [vmem:[%s1 + $0x1cc] sm:$0xf]
  %v147 = vld [vmem:[%s1 + $0x1d0] sm:$0xf]
  %v148 = vld [vmem:[%s1 + $0x1d4] sm:$0xf]
  %v149 = vld [vmem:[%s1 + $0x1d8] sm:$0xf]
  %v150 = vld [vmem:[%s1 + $0x1dc] sm:$0xf]
  %v151 = vld [vmem:[%s1 + $0x1e0] sm:$0xf]
  %v152 = vld [vmem:[%s1 + $0x1e4] sm:$0xf]
  %v153 = vld [vmem:[%s1 + $0x1e8] sm:$0xf]
  %v154 = vld [vmem:[%s1 + $0x1ec] sm:$0xf]
  %v155 = vld [vmem:[%s1 + $0x1f0] sm:$0xf]
  %v156 = vld [vmem:[%s1 + $0x1f4] sm:$0xf]
  %v157 = vld [vmem:[%s1 + $0x1f8] sm:$0xf]
  %v158 = vld [vmem:[%s1 + $0x1fc] sm:$0xf]
  %v159 = vld [vmem:[%s2] sm:$0x1]
  %v161 = vlaneseq
  %v162 = vshrl.u32 %v161, 7
  %v163 = vsub.s32 0, %v162
  %v164 = vrot.slane %v159, %v163
  %v170 = vunpack.c.l.b16 %v27
  %v171 = vunpack.c.h.b16 %v27
  %v172 = vunpack.c.l.b16 %v28
  %v173 = vunpack.c.h.b16 %v28
  %v174 = vunpack.c.l.b16 %v29
  %v175 = vunpack.c.h.b16 %v29
  %v176 = vunpack.c.l.b16 %v30
  %v177 = vunpack.c.h.b16 %v30
  %v178 = vpack.c.b16 %v170, %v170
  %v179 = vpack.c.b16 %v171, %v171
  %v180 = vpack.c.b16 %v172, %v172
  %v181 = vpack.c.b16 %v173, %v173
  %v182 = vpack.c.b16 %v174, %v174
  %v183 = vpack.c.b16 %v175, %v175
  %v184 = vpack.c.b16 %v176, %v176
  %v185 = vpack.c.b16 %v177, %v177
  %v322 = vunpack.c.l.b16 %v31
  %v323 = vunpack.c.l.b16 %v32
  %v324 = vunpack.c.l.b16 %v33
  %v325 = vunpack.c.l.b16 %v34
  %v326 = vunpack.c.l.b16 %v35
  %v327 = vunpack.c.l.b16 %v36
  %v328 = vunpack.c.l.b16 %v37
  %v329 = vunpack.c.l.b16 %v38
  %v330 = vunpack.c.l.b16 %v39
  %v331 = vunpack.c.l.b16 %v40
  %v332 = vunpack.c.l.b16 %v41
  %v333 = vunpack.c.l.b16 %v42
  %v334 = vunpack.c.l.b16 %v43
  %v335 = vunpack.c.l.b16 %v44
  %v336 = vunpack.c.l.b16 %v45
  %v337 = vunpack.c.l.b16 %v46
  %v338 = vunpack.c.l.b16 %v47
  %v339 = vunpack.c.l.b16 %v48
  %v340 = vunpack.c.l.b16 %v49
  %v341 = vunpack.c.l.b16 %v50
  %v342 = vunpack.c.l.b16 %v51
  %v343 = vunpack.c.l.b16 %v52
  %v344 = vunpack.c.l.b16 %v53
  %v345 = vunpack.c.l.b16 %v54
  %v346 = vunpack.c.l.b16 %v55
  %v347 = vunpack.c.l.b16 %v56
  %v348 = vunpack.c.l.b16 %v57
  %v349 = vunpack.c.l.b16 %v58
  %v350 = vunpack.c.l.b16 %v59
  %v351 = vunpack.c.l.b16 %v60
  %v352 = vunpack.c.l.b16 %v61
  %v353 = vunpack.c.l.b16 %v62
  %v354 = vunpack.c.l.b16 %v63
  %v355 = vunpack.c.l.b16 %v64
  %v356 = vunpack.c.l.b16 %v65
  %v357 = vunpack.c.l.b16 %v66
  %v358 = vunpack.c.l.b16 %v67
  %v359 = vunpack.c.l.b16 %v68
  %v360 = vunpack.c.l.b16 %v69
  %v361 = vunpack.c.l.b16 %v70
  %v362 = vunpack.c.l.b16 %v71
  %v363 = vunpack.c.l.b16 %v72
  %v364 = vunpack.c.l.b16 %v73
  %v365 = vunpack.c.l.b16 %v74
  %v366 = vunpack.c.l.b16 %v75
  %v367 = vunpack.c.l.b16 %v76
  %v368 = vunpack.c.l.b16 %v77
  %v369 = vunpack.c.l.b16 %v78
  %v370 = vunpack.c.l.b16 %v79
  %v371 = vunpack.c.l.b16 %v80
  %v372 = vunpack.c.l.b16 %v81
  %v373 = vunpack.c.l.b16 %v82
  %v374 = vunpack.c.l.b16 %v83
  %v375 = vunpack.c.l.b16 %v84
  %v376 = vunpack.c.l.b16 %v85
  %v377 = vunpack.c.l.b16 %v86
  %v378 = vunpack.c.l.b16 %v87
  %v379 = vunpack.c.l.b16 %v88
  %v380 = vunpack.c.l.b16 %v89
  %v381 = vunpack.c.l.b16 %v90
  %v382 = vunpack.c.l.b16 %v91
  %v383 = vunpack.c.l.b16 %v92
  %v384 = vunpack.c.l.b16 %v93
  %v385 = vunpack.c.l.b16 %v94
  %v386 = vunpack.c.l.b16 %v95
  %v387 = vunpack.c.l.b16 %v96
  %v388 = vunpack.c.l.b16 %v97
  %v389 = vunpack.c.l.b16 %v98
  %v390 = vunpack.c.l.b16 %v99
  %v391 = vunpack.c.l.b16 %v100
  %v392 = vunpack.c.l.b16 %v101
  %v393 = vunpack.c.l.b16 %v102
  %v394 = vunpack.c.l.b16 %v103
  %v395 = vunpack.c.l.b16 %v104
  %v396 = vunpack.c.l.b16 %v105
  %v397 = vunpack.c.l.b16 %v106
  %v398 = vunpack.c.l.b16 %v107
  %v399 = vunpack.c.l.b16 %v108
  %v400 = vunpack.c.l.b16 %v109
  %v401 = vunpack.c.l.b16 %v110
  %v402 = vunpack.c.l.b16 %v111
  %v403 = vunpack.c.l.b16 %v112
  %v404 = vunpack.c.l.b16 %v113
  %v405 = vunpack.c.l.b16 %v114
  %v406 = vunpack.c.l.b16 %v115
  %v407 = vunpack.c.l.b16 %v116
  %v408 = vunpack.c.l.b16 %v117
  %v409 = vunpack.c.l.b16 %v118
  %v410 = vunpack.c.l.b16 %v119
  %v411 = vunpack.c.l.b16 %v120
  %v412 = vunpack.c.l.b16 %v121
  %v413 = vunpack.c.l.b16 %v122
  %v414 = vunpack.c.l.b16 %v123
  %v415 = vunpack.c.l.b16 %v124
  %v416 = vunpack.c.l.b16 %v125
  %v417 = vunpack.c.l.b16 %v126
  %v418 = vunpack.c.l.b16 %v127
  %v419 = vunpack.c.l.b16 %v128
  %v420 = vunpack.c.l.b16 %v129
  %v421 = vunpack.c.l.b16 %v130
  %v422 = vunpack.c.l.b16 %v131
  %v423 = vunpack.c.l.b16 %v132
  %v424 = vunpack.c.l.b16 %v133
  %v425 = vunpack.c.l.b16 %v134
  %v426 = vunpack.c.l.b16 %v135
  %v427 = vunpack.c.l.b16 %v136
  %v428 = vunpack.c.l.b16 %v137
  %v429 = vunpack.c.l.b16 %v138
  %v430 = vunpack.c.l.b16 %v139
  %v431 = vunpack.c.l.b16 %v140
  %v432 = vunpack.c.l.b16 %v141
  %v433 = vunpack.c.l.b16 %v142
  %v434 = vunpack.c.l.b16 %v143
  %v435 = vunpack.c.l.b16 %v144
  %v436 = vunpack.c.l.b16 %v145
  %v437 = vunpack.c.l.b16 %v146
  %v438 = vunpack.c.l.b16 %v147
  %v439 = vunpack.c.l.b16 %v148
  %v440 = vunpack.c.l.b16 %v149
  %v441 = vunpack.c.l.b16 %v150
  %v442 = vunpack.c.l.b16 %v151
  %v443 = vunpack.c.l.b16 %v152
  %v444 = vunpack.c.l.b16 %v153
  %v445 = vunpack.c.l.b16 %v154
  %v446 = vunpack.c.l.b16 %v155
  %v447 = vunpack.c.l.b16 %v156
  %v448 = vunpack.c.l.b16 %v157
  %v449 = vunpack.c.l.b16 %v158
  %v450 = vpack.c.b16 %v323, %v322
  %v451 = vpack.c.b16 %v325, %v324
  %v452 = vpack.c.b16 %v327, %v326
  %v453 = vpack.c.b16 %v329, %v328
  %v454 = vpack.c.b16 %v331, %v330
  %v455 = vpack.c.b16 %v333, %v332
  %v456 = vpack.c.b16 %v335, %v334
  %v457 = vpack.c.b16 %v337, %v336
  %v458 = vpack.c.b16 %v339, %v338
  %v459 = vpack.c.b16 %v341, %v340
  %v460 = vpack.c.b16 %v343, %v342
  %v461 = vpack.c.b16 %v345, %v344
  %v462 = vpack.c.b16 %v347, %v346
  %v463 = vpack.c.b16 %v349, %v348
  %v464 = vpack.c.b16 %v351, %v350
  %v465 = vpack.c.b16 %v353, %v352
  %v466 = vpack.c.b16 %v355, %v354
  %v467 = vpack.c.b16 %v357, %v356
  %v468 = vpack.c.b16 %v359, %v358
  %v469 = vpack.c.b16 %v361, %v360
  %v470 = vpack.c.b16 %v363, %v362
  %v471 = vpack.c.b16 %v365, %v364
  %v472 = vpack.c.b16 %v367, %v366
  %v473 = vpack.c.b16 %v369, %v368
  %v474 = vpack.c.b16 %v371, %v370
  %v475 = vpack.c.b16 %v373, %v372
  %v476 = vpack.c.b16 %v375, %v374
  %v477 = vpack.c.b16 %v377, %v376
  %v478 = vpack.c.b16 %v379, %v378
  %v479 = vpack.c.b16 %v381, %v380
  %v480 = vpack.c.b16 %v383, %v382
  %v481 = vpack.c.b16 %v385, %v384
  %v482 = vpack.c.b16 %v387, %v386
  %v483 = vpack.c.b16 %v389, %v388
  %v484 = vpack.c.b16 %v391, %v390
  %v485 = vpack.c.b16 %v393, %v392
  %v486 = vpack.c.b16 %v395, %v394
  %v487 = vpack.c.b16 %v397, %v396
  %v488 = vpack.c.b16 %v399, %v398
  %v489 = vpack.c.b16 %v401, %v400
  %v490 = vpack.c.b16 %v403, %v402
  %v491 = vpack.c.b16 %v405, %v404
  %v492 = vpack.c.b16 %v407, %v406
  %v493 = vpack.c.b16 %v409, %v408
  %v494 = vpack.c.b16 %v411, %v410
  %v495 = vpack.c.b16 %v413, %v412
  %v496 = vpack.c.b16 %v415, %v414
  %v497 = vpack.c.b16 %v417, %v416
  %v498 = vpack.c.b16 %v419, %v418
  %v499 = vpack.c.b16 %v421, %v420
  %v500 = vpack.c.b16 %v423, %v422
  %v501 = vpack.c.b16 %v425, %v424
  %v502 = vpack.c.b16 %v427, %v426
  %v503 = vpack.c.b16 %v429, %v428
  %v504 = vpack.c.b16 %v431, %v430
  %v505 = vpack.c.b16 %v433, %v432
  %v506 = vpack.c.b16 %v435, %v434
  %v507 = vpack.c.b16 %v437, %v436
  %v508 = vpack.c.b16 %v439, %v438
  %v509 = vpack.c.b16 %v441, %v440
  %v510 = vpack.c.b16 %v443, %v442
  %v511 = vpack.c.b16 %v445, %v444
  %v512 = vpack.c.b16 %v447, %v446
  %v513 = vpack.c.b16 %v449, %v448
  %578 = vmatprep.subr.bf16.mxu0 0
  %579 = vmatpush1.bf16.msra.mxu0 %v450
  %580 = vmatprep.subr.bf16.mxu0 0
  %581 = vmatpush1.bf16.msra.mxu0 %v451
  %582 = vmatprep.subr.bf16.mxu0 0
  %583 = vmatpush1.bf16.msra.mxu0 %v452
  %584 = vmatprep.subr.bf16.mxu0 0
  %585 = vmatpush1.bf16.msra.mxu0 %v453
  %586 = vmatprep.subr.bf16.mxu0 0
  %587 = vmatpush1.bf16.msra.mxu0 %v454
  %588 = vmatprep.subr.bf16.mxu0 0
  %589 = vmatpush1.bf16.msra.mxu0 %v455
  %590 = vmatprep.subr.bf16.mxu0 0
  %591 = vmatpush1.bf16.msra.mxu0 %v456
  %592 = vmatprep.subr.bf16.mxu0 0
  %593 = vmatpush1.bf16.msra.mxu0 %v457
  %594 = vmatprep.subr.bf16.mxu0 0
  %595 = vmatpush1.bf16.msra.mxu0 %v458
  %596 = vmatprep.subr.bf16.mxu0 0
  %597 = vmatpush1.bf16.msra.mxu0 %v459
  %598 = vmatprep.subr.bf16.mxu0 0
  %599 = vmatpush1.bf16.msra.mxu0 %v460
  %600 = vmatprep.subr.bf16.mxu0 0
  %601 = vmatpush1.bf16.msra.mxu0 %v461
  %602 = vmatprep.subr.bf16.mxu0 0
  %603 = vmatpush1.bf16.msra.mxu0 %v462
  %604 = vmatprep.subr.bf16.mxu0 0
  %605 = vmatpush1.bf16.msra.mxu0 %v463
  %606 = vmatprep.subr.bf16.mxu0 0
  %607 = vmatpush1.bf16.msra.mxu0 %v464
  %608 = vmatprep.subr.bf16.mxu0 0
  %609 = vmatpush1.bf16.msra.mxu0 %v465
  %610 = vmatprep.mubr.bf16.mxu0 %v179
  %611 = vmatmul.mubr.bf16.gmra.mrb[0].mxu0 %v178
  %v612 = vpop.f32.mrb[0].mxu0
  %v613 = vadd.f32 %v164, %v612
  %v614 = vpop.f32.mrb[0].mxu0
  %v615 = vpop.f32.mrb[0].mxu0
  %v616 = vpop.f32.mrb[0].mxu0
  %617 = vdwg.mxu0
  %618 = vmatprep.subr.bf16.mxu0 0
  %619 = vmatpush1.bf16.msra.mxu0 %v466
  %620 = vmatprep.subr.bf16.mxu0 0
  %621 = vmatpush1.bf16.msra.mxu0 %v467
  %622 = vmatprep.subr.bf16.mxu0 0
  %623 = vmatpush1.bf16.msra.mxu0 %v468
  %624 = vmatprep.subr.bf16.mxu0 0
  %625 = vmatpush1.bf16.msra.mxu0 %v469
  %626 = vmatprep.subr.bf16.mxu0 0
  %627 = vmatpush1.bf16.msra.mxu0 %v470
  %628 = vmatprep.subr.bf16.mxu0 0
  %629 = vmatpush1.bf16.msra.mxu0 %v471
  %630 = vmatprep.subr.bf16.mxu0 0
  %631 = vmatpush1.bf16.msra.mxu0 %v472
  %632 = vmatprep.subr.bf16.mxu0 0
  %633 = vmatpush1.bf16.msra.mxu0 %v473
  %634 = vmatprep.subr.bf16.mxu0 0
  %635 = vmatpush1.bf16.msra.mxu0 %v474
  %636 = vmatprep.subr.bf16.mxu0 0
  %637 = vmatpush1.bf16.msra.mxu0 %v475
  %638 = vmatprep.subr.bf16.mxu0 0
  %639 = vmatpush1.bf16.msra.mxu0 %v476
  %640 = vmatprep.subr.bf16.mxu0 0
  %641 = vmatpush1.bf16.msra.mxu0 %v477
  %642 = vmatprep.subr.bf16.mxu0 0
  %643 = vmatpush1.bf16.msra.mxu0 %v478
  %644 = vmatprep.subr.bf16.mxu0 0
  %645 = vmatpush1.bf16.msra.mxu0 %v479
  %646 = vmatprep.subr.bf16.mxu0 0
  %647 = vmatpush1.bf16.msra.mxu0 %v480
  %648 = vmatprep.subr.bf16.mxu0 0
  %649 = vmatpush1.bf16.msra.mxu0 %v481
  %650 = vmatprep.mubr.bf16.mxu0 %v181
  %651 = vmatmul.mubr.bf16.gmra.mrb[0].mxu0 %v180
  %v652 = vpop.f32.mrb[0].mxu0
  %v653 = vadd.f32 %v613, %v652
  %v654 = vpop.f32.mrb[0].mxu0
  %v655 = vpop.f32.mrb[0].mxu0
  %v656 = vpop.f32.mrb[0].mxu0
  %657 = vdwg.mxu0
  %658 = vmatprep.subr.bf16.mxu0 0
  %659 = vmatpush1.bf16.msra.mxu0 %v482
  %660 = vmatprep.subr.bf16.mxu0 0
  %661 = vmatpush1.bf16.msra.mxu0 %v483
  %662 = vmatprep.subr.bf16.mxu0 0
  %663 = vmatpush1.bf16.msra.mxu0 %v484
  %664 = vmatprep.subr.bf16.mxu0 0
  %665 = vmatpush1.bf16.msra.mxu0 %v485
  %666 = vmatprep.subr.bf16.mxu0 0
  %667 = vmatpush1.bf16.msra.mxu0 %v486
  %668 = vmatprep.subr.bf16.mxu0 0
  %669 = vmatpush1.bf16.msra.mxu0 %v487
  %670 = vmatprep.subr.bf16.mxu0 0
  %671 = vmatpush1.bf16.msra.mxu0 %v488
  %672 = vmatprep.subr.bf16.mxu0 0
  %673 = vmatpush1.bf16.msra.mxu0 %v489
  %674 = vmatprep.subr.bf16.mxu0 0
  %675 = vmatpush1.bf16.msra.mxu0 %v490
  %676 = vmatprep.subr.bf16.mxu0 0
  %677 = vmatpush1.bf16.msra.mxu0 %v491
  %678 = vmatprep.subr.bf16.mxu0 0
  %679 = vmatpush1.bf16.msra.mxu0 %v492
  %680 = vmatprep.subr.bf16.mxu0 0
  %681 = vmatpush1.bf16.msra.mxu0 %v493
  %682 = vmatprep.subr.bf16.mxu0 0
  %683 = vmatpush1.bf16.msra.mxu0 %v494
  %684 = vmatprep.subr.bf16.mxu0 0
  %685 = vmatpush1.bf16.msra.mxu0 %v495
  %686 = vmatprep.subr.bf16.mxu0 0
  %687 = vmatpush1.bf16.msra.mxu0 %v496
  %688 = vmatprep.subr.bf16.mxu0 0
  %689 = vmatpush1.bf16.msra.mxu0 %v497
  %690 = vmatprep.mubr.bf16.mxu0 %v183
  %691 = vmatmul.mubr.bf16.gmra.mrb[0].mxu0 %v182
  %v692 = vpop.f32.mrb[0].mxu0
  %v693 = vadd.f32 %v653, %v692
  %v694 = vpop.f32.mrb[0].mxu0
  %v695 = vpop.f32.mrb[0].mxu0
  %v696 = vpop.f32.mrb[0].mxu0
  %697 = vdwg.mxu0
  %698 = vmatprep.subr.bf16.mxu0 0
  %699 = vmatpush1.bf16.msra.mxu0 %v498
  %700 = vmatprep.subr.bf16.mxu0 0
  %701 = vmatpush1.bf16.msra.mxu0 %v499
  %702 = vmatprep.subr.bf16.mxu0 0
  %703 = vmatpush1.bf16.msra.mxu0 %v500
  %704 = vmatprep.subr.bf16.mxu0 0
  %705 = vmatpush1.bf16.msra.mxu0 %v501
  %706 = vmatprep.subr.bf16.mxu0 0
  %707 = vmatpush1.bf16.msra.mxu0 %v502
  %708 = vmatprep.subr.bf16.mxu0 0
  %709 = vmatpush1.bf16.msra.mxu0 %v503
  %710 = vmatprep.subr.bf16.mxu0 0
  %711 = vmatpush1.bf16.msra.mxu0 %v504
  %712 = vmatprep.subr.bf16.mxu0 0
  %713 = vmatpush1.bf16.msra.mxu0 %v505
  %714 = vmatprep.subr.bf16.mxu0 0
  %715 = vmatpush1.bf16.msra.mxu0 %v506
  %716 = vmatprep.subr.bf16.mxu0 0
  %717 = vmatpush1.bf16.msra.mxu0 %v507
  %718 = vmatprep.subr.bf16.mxu0 0
  %719 = vmatpush1.bf16.msra.mxu0 %v508
  %720 = vmatprep.subr.bf16.mxu0 0
  %721 = vmatpush1.bf16.msra.mxu0 %v509
  %722 = vmatprep.subr.bf16.mxu0 0
  %723 = vmatpush1.bf16.msra.mxu0 %v510
  %724 = vmatprep.subr.bf16.mxu0 0
  %725 = vmatpush1.bf16.msra.mxu0 %v511
  %726 = vmatprep.subr.bf16.mxu0 0
  %727 = vmatpush1.bf16.msra.mxu0 %v512
  %728 = vmatprep.subr.bf16.mxu0 0
  %729 = vmatpush1.bf16.msra.mxu0 %v513
  %730 = vmatprep.mubr.bf16.mxu0 %v185
  %731 = vmatmul.mubr.bf16.gmra.mrb[0].mxu0 %v184
  %v732 = vpop.f32.mrb[0].mxu0
  %v733 = vadd.f32 %v693, %v732
  %v734 = vpop.f32.mrb[0].mxu0
  %v735 = vpop.f32.mrb[0].mxu0
  %v736 = vpop.f32.mrb[0].mxu0
  %737 = vdwg.mxu0
  %v738 = vmax.f32 %v733, 0.0
  %v739 = vpack.c.bf16 %v738, %v738
  %v740 = vld [vmem:[%s3] sm:$0xf]
  %v741 = vld [vmem:[%s3 + $0x4] sm:$0xf]
  %v742 = vld [vmem:[%s3 + $0x8] sm:$0xf]
  %v743 = vld [vmem:[%s3 + $0xc] sm:$0xf]
  %v744 = vld [vmem:[%s3 + $0x10] sm:$0xf]
  %v745 = vld [vmem:[%s3 + $0x14] sm:$0xf]
  %v746 = vld [vmem:[%s3 + $0x18] sm:$0xf]
  %v747 = vld [vmem:[%s3 + $0x1c] sm:$0xf]
  %v748 = vld [vmem:[%s3 + $0x20] sm:$0xf]
  %v749 = vld [vmem:[%s3 + $0x24] sm:$0xf]
  %v750 = vld [vmem:[%s3 + $0x28] sm:$0xf]
  %v751 = vld [vmem:[%s3 + $0x2c] sm:$0xf]
  %v752 = vld [vmem:[%s3 + $0x30] sm:$0xf]
  %v753 = vld [vmem:[%s3 + $0x34] sm:$0xf]
  %v754 = vld [vmem:[%s3 + $0x38] sm:$0xf]
  %v755 = vld [vmem:[%s3 + $0x3c] sm:$0xf]
  %v756 = vld [vmem:[%s4] sm:$0x1]
  %v758 = vlaneseq
  %v759 = vshrl.u32 %v758, 7
  %v760 = vsub.s32 0, %v759
  %v761 = vrot.slane %v756, %v760
  %v779 = vunpack.c.l.b16 %v740
  %v780 = vunpack.c.l.b16 %v741
  %v781 = vunpack.c.l.b16 %v742
  %v782 = vunpack.c.l.b16 %v743
  %v783 = vunpack.c.l.b16 %v744
  %v784 = vunpack.c.l.b16 %v745
  %v785 = vunpack.c.l.b16 %v746
  %v786 = vunpack.c.l.b16 %v747
  %v787 = vunpack.c.l.b16 %v748
  %v788 = vunpack.c.l.b16 %v749
  %v789 = vunpack.c.l.b16 %v750
  %v790 = vunpack.c.l.b16 %v751
  %v791 = vunpack.c.l.b16 %v752
  %v792 = vunpack.c.l.b16 %v753
  %v793 = vunpack.c.l.b16 %v754
  %v794 = vunpack.c.l.b16 %v755
  %v795 = vpack.c.b16 %v780, %v779
  %v796 = vpack.c.b16 %v782, %v781
  %v797 = vpack.c.b16 %v784, %v783
  %v798 = vpack.c.b16 %v786, %v785
  %v799 = vpack.c.b16 %v788, %v787
  %v800 = vpack.c.b16 %v790, %v789
  %v801 = vpack.c.b16 %v792, %v791
  %v802 = vpack.c.b16 %v794, %v793
  %811 = vmatprep.subr.bf16.mxu0 0
  %812 = vmatpush1.bf16.msra.mxu0 %v795
  %813 = vmatprep.subr.bf16.mxu0 0
  %814 = vmatpush1.bf16.msra.mxu0 %v796
  %815 = vmatprep.subr.bf16.mxu0 0
  %816 = vmatpush1.bf16.msra.mxu0 %v797
  %817 = vmatprep.subr.bf16.mxu0 0
  %818 = vmatpush1.bf16.msra.mxu0 %v798
  %819 = vmatprep.subr.bf16.mxu0 0
  %820 = vmatpush1.bf16.msra.mxu0 %v799
  %821 = vmatprep.subr.bf16.mxu0 0
  %822 = vmatpush1.bf16.msra.mxu0 %v800
  %823 = vmatprep.subr.bf16.mxu0 0
  %824 = vmatpush1.bf16.msra.mxu0 %v801
  %825 = vmatprep.subr.bf16.mxu0 0
  %826 = vmatpush1.bf16.msra.mxu0 %v802
  %827 = vmatprep.subr.bf16.mxu0 0
  %828 = vmatpush1.bf16.msra.mxu0 0
  %829 = vmatprep.subr.bf16.mxu0 0
  %830 = vmatpush1.bf16.msra.mxu0 0
  %831 = vmatprep.subr.bf16.mxu0 0
  %832 = vmatpush1.bf16.msra.mxu0 0
  %833 = vmatprep.subr.bf16.mxu0 0
  %834 = vmatpush1.bf16.msra.mxu0 0
  %835 = vmatprep.subr.bf16.mxu0 0
  %836 = vmatpush1.bf16.msra.mxu0 0
  %837 = vmatprep.subr.bf16.mxu0 0
  %838 = vmatpush1.bf16.msra.mxu0 0
  %839 = vmatprep.subr.bf16.mxu0 0
  %840 = vmatpush1.bf16.msra.mxu0 0
  %841 = vmatprep.subr.bf16.mxu0 0
  %842 = vmatpush1.bf16.msra.mxu0 0
  %843 = vmatprep.mubr.bf16.mxu0 0
  %844 = vmatmul.mubr.bf16.gmra.mrb[0].mxu0 %v739
  %v845 = vpop.f32.mrb[0].mxu0
  %v846 = vadd.f32 %v761, %v845
  %v847 = vpop.f32.mrb[0].mxu0
  %v848 = vpop.f32.mrb[0].mxu0
  %v849 = vpop.f32.mrb[0].mxu0
  %850 = vdwg.mxu0
  %v851 = vmax.f32 %v846, 0.0
  %v852 = vpack.c.bf16 %v851, %v851
  %v853 = vld [vmem:[%s5] sm:$0xf]
  %v854 = vld [vmem:[%s5 + $0x4] sm:$0xf]
  %v855 = vld [vmem:[%s5 + $0x8] sm:$0xf]
  %v856 = vld [vmem:[%s5 + $0xc] sm:$0xf]
  %v857 = vld [vmem:[%s5 + $0x10] sm:$0xf]
  %v858 = vld [vmem:[%s5 + $0x14] sm:$0xf]
  %v859 = vld [vmem:[%s5 + $0x18] sm:$0xf]
  %v860 = vld [vmem:[%s5 + $0x1c] sm:$0xf]
  %v861 = vld [vmem:[%s6] sm:$0x1]
  %v863 = vlaneseq
  %v864 = vshrl.u32 %v863, 7
  %v865 = vsub.s32 0, %v864
  %v866 = vrot.slane %v861, %v865
  %v876 = vunpack.c.l.b16 %v853
  %v877 = vunpack.c.l.b16 %v854
  %v878 = vunpack.c.l.b16 %v855
  %v879 = vunpack.c.l.b16 %v856
  %v880 = vunpack.c.l.b16 %v857
  %v881 = vunpack.c.l.b16 %v858
  %v882 = vunpack.c.l.b16 %v859
  %v883 = vunpack.c.l.b16 %v860
  %v884 = vpack.c.b16 %v877, %v876
  %v885 = vpack.c.b16 %v879, %v878
  %v886 = vpack.c.b16 %v881, %v880
  %v887 = vpack.c.b16 %v883, %v882
  %vm892 = vcmask 523264
  %v894 = vsel %vm892, %v852, 0
  %896 = vmatprep.subr.bf16.mxu0 0
  %897 = vmatpush1.bf16.msra.mxu0 %v884
  %898 = vmatprep.subr.bf16.mxu0 0
  %899 = vmatpush1.bf16.msra.mxu0 %v885
  %900 = vmatprep.subr.bf16.mxu0 0
  %901 = vmatpush1.bf16.msra.mxu0 %v886
  %902 = vmatprep.subr.bf16.mxu0 0
  %903 = vmatpush1.bf16.msra.mxu0 %v887
  %904 = vmatprep.subr.bf16.mxu0 0
  %905 = vmatpush1.bf16.msra.mxu0 0
  %906 = vmatprep.subr.bf16.mxu0 0
  %907 = vmatpush1.bf16.msra.mxu0 0
  %908 = vmatprep.subr.bf16.mxu0 0
  %909 = vmatpush1.bf16.msra.mxu0 0
  %910 = vmatprep.subr.bf16.mxu0 0
  %911 = vmatpush1.bf16.msra.mxu0 0
  %912 = vmatprep.subr.bf16.mxu0 0
  %913 = vmatpush1.bf16.msra.mxu0 0
  %914 = vmatprep.subr.bf16.mxu0 0
  %915 = vmatpush1.bf16.msra.mxu0 0
  %916 = vmatprep.subr.bf16.mxu0 0
  %917 = vmatpush1.bf16.msra.mxu0 0
  %918 = vmatprep.subr.bf16.mxu0 0
  %919 = vmatpush1.bf16.msra.mxu0 0
  %920 = vmatprep.subr.bf16.mxu0 0
  %921 = vmatpush1.bf16.msra.mxu0 0
  %922 = vmatprep.subr.bf16.mxu0 0
  %923 = vmatpush1.bf16.msra.mxu0 0
  %924 = vmatprep.subr.bf16.mxu0 0
  %925 = vmatpush1.bf16.msra.mxu0 0
  %926 = vmatprep.subr.bf16.mxu0 0
  %927 = vmatpush1.bf16.msra.mxu0 0
  %928 = vmatprep.mubr.bf16.mxu0 0
  %929 = vmatmul.mubr.bf16.gmra.mrb[0].mxu0 %v894
  %v930 = vpop.f32.mrb[0].mxu0
  %v931 = vadd.f32 %v866, %v930
  %v932 = vpop.f32.mrb[0].mxu0
  %v933 = vpop.f32.mrb[0].mxu0
  %v934 = vpop.f32.mrb[0].mxu0
  %935 = vdwg.mxu0
  %936 = vmax.xlane.f32.xlu0 %v931
  %v937 = vpop.xlane.xlu0 %936
  %v938 = vsub.f32 %v931, %v937
  %v939 = vmul.f32 %v938, 1.442695
  %v940 = vpow.pop %v939
  %941 = vadd.xlane.f32.xlu0 %v940
  %v942 = vpop.xlane.xlu0 %941
  %v943 = vlog2.pop %v942
  %v944 = vmul.f32 %v943, 0.6931472
  %v945 = vsub.f32 %v938, %v944
  %946 = vst [vmem:[%s7] sm:$0xff] %v945
  // Predicated region
  $region30: #{arena_network_forward.1} parent=0 // pred_check
    _
  $region31: #{arena_network_forward.1} parent=0 // pred_check_branch
    %948 = sbr.rel (0) target = $region33
  $region32: #{arena_network_forward.1} parent=0 // pred_region
    _
  $region33: #{arena_network_forward.1} parent=0 // pred_fallthru
    _
  // Predicated region
  $region34: #{arena_network_forward.1} parent=0 // pred_check
    _
  $region35: #{arena_network_forward.1} parent=0 // pred_check_branch
    %950 = sbr.rel (0) target = $region37
  $region36: #{arena_network_forward.1} parent=0 // pred_region
    _
  $region37: #{arena_network_forward.1} parent=0 // pred_fallthru
    _

</llo_original>
